<compile_context>
chip_gen: v7x
topology: tpu7x:2x2x1
jax: 0.10.0
libtpu: 0.0.40
codegen_flags: <defaults>
</compile_context>

<pallas_src>
import math

import jax
import jax.numpy as jnp
from jax.experimental import pallas as pl
from jax.experimental.pallas import tpu as pltpu

# Module constants (fixed by MVKE.__init__)
E = 100   # embedding size
V = 3     # number of virtual kernels
C = 4     # number of user fields (sequence dim S of x)
DK = 100  # attention scale denominator
EP = 128  # embedding size padded to a full vreg lane width

# Example sizes
B = 2     # batch
T = 4     # number of tags per sample


def mvke_kernel(x_ref, tag_ref, w1_ref, b1_ref, w4_ref, b4_ref,
                fc2ts_ref, fc3ts_ref, out_ref):
    Bb, S, Ep = x_ref.shape
    Tt = tag_ref.shape[1]
    Vv = fc2ts_ref.shape[1]

    x3 = x_ref[...]                       # (B, S, Ep)
    tag3 = tag_ref[...]                   # (B, T, Ep)

    x2 = x3.reshape(Bb * S, Ep)           # flatten batch for one big-M matmul
    tag2 = tag3.reshape(Bb * Tt, Ep)

    # fc1 over the whole flattened batch (MXU, M = B*S)
    fc1 = jnp.dot(x2, w1_ref[...], preferred_element_type=jnp.float32) + b1_ref[...]
    # scores1 = fc1 @ (fc2^T / sqrt(dk))  -- scale & fc2 bias pre-folded
    scores1 = jnp.dot(fc1, fc2ts_ref[...], preferred_element_type=jnp.float32)  # (B*S, V)

    # Mask fields whose embedding is all-zero (sign(sum|x|) == 0)
    row_abs = jnp.sum(jnp.abs(x2), axis=1, keepdims=True)                        # (B*S, 1)
    neg_big = jnp.float32(-2.0 ** 32 + 1.0)
    masked = jnp.where(row_abs == 0.0, neg_big, scores1)                         # (B*S, V)

    masked3 = masked.reshape(Bb, S, Vv)
    fc13 = fc1.reshape(Bb, S, Ep)

    # softmax over the field dim S (torch Softmax(dim=1) on (B, S, V))
    m1 = jnp.max(masked3, axis=1, keepdims=True)
    e1 = jnp.exp(masked3 - m1)
    sm1 = e1 / jnp.sum(e1, axis=1, keepdims=True)                                # (B, S, V)

    # weighted sum 1: ws1[b, v, :] = sum_s sm1[b, s, v] * fc1[b, s, :]
    # K = S = 4 -> unrolled VPU broadcast-FMAs instead of an MXU push.
    ws1 = sm1[:, 0, :][:, :, None] * fc13[:, 0, :][:, None, :]                   # (B, V, Ep)
    for s in range(1, S):
        ws1 = ws1 + sm1[:, s, :][:, :, None] * fc13[:, s, :][:, None, :]

    # fc4 over the flattened batch (MXU, M = B*T), scores2 with fc3^T/sqrt(dk)
    fc4 = jnp.dot(tag2, w4_ref[...], preferred_element_type=jnp.float32) + b4_ref[...]
    scores2 = jnp.dot(fc4, fc3ts_ref[...], preferred_element_type=jnp.float32)   # (B*T, V)
    scores23 = scores2.reshape(Bb, Tt, Vv)

    # softmax over the tag dim T (torch Softmax(dim=1) on (B, T, V)) -- exact
    m2 = jnp.max(scores23, axis=1, keepdims=True)
    e2 = jnp.exp(scores23 - m2)
    sm2 = e2 / jnp.sum(e2, axis=1, keepdims=True)                                # (B, T, V)

    # weighted sum 2: ws2[b, t, :] = sum_v sm2[b, t, v] * ws1[b, v, :]
    # K = V = 3 -> unrolled VPU broadcast-FMAs.
    ws2 = sm2[:, :, 0][:, :, None] * ws1[:, 0, :][:, None, :]                    # (B, T, Ep)
    for v in range(1, Vv):
        ws2 = ws2 + sm2[:, :, v][:, :, None] * ws1[:, v, :][:, None, :]

    # final dot product with tag_embedding; padded lanes are zero on both sides
    out_ref[...] = jnp.sum(ws2 * tag3, axis=2)                                   # (B, T)


def mvke_forward(x, tag_embedding, params):
    w1, b1, w2, b2, w3, b3, w4, b4, vk = params
    Bb, S, Ee = x.shape
    Tt = tag_embedding.shape[1]
    Vv = vk.shape[0]
    scale = 1.0 / math.sqrt(DK)

    # Batch-invariant precompute, hoisted out of the kernel: fc2/fc3 of vk,
    # pre-transposed to (E, V) with the 1/sqrt(dk) scale folded in.
    fc2 = vk @ w2 + b2                                        # (V, E)
    fc3 = vk @ w3 + b3                                        # (V, E)
    fc2ts = jnp.zeros((EP, Vv), jnp.float32).at[:Ee, :].set(fc2.T * scale)
    fc3ts = jnp.zeros((EP, Vv), jnp.float32).at[:Ee, :].set(fc3.T * scale)

    # Zero-pad the embedding axis 100 -> 128 so every lane dim is vreg-aligned.
    def pad_cols(a):
        return jnp.pad(a, [(0, 0)] * (a.ndim - 1) + [(0, EP - a.shape[-1])])

    xp = pad_cols(x)                                          # (B, S, 128)
    tagp = pad_cols(tag_embedding)                            # (B, T, 128)
    w1p = jnp.pad(w1, ((0, EP - Ee), (0, EP - Ee)))
    b1p = pad_cols(b1)                                        # (1, 128)
    w4p = jnp.pad(w4, ((0, EP - Ee), (0, EP - Ee)))
    b4p = pad_cols(b4)

    out = pl.pallas_call(
        mvke_kernel,
        out_shape=jax.ShapeDtypeStruct((Bb, Tt), jnp.float32),
        grid=(1,),                                            # single fused step
        in_specs=[
            pl.BlockSpec((Bb, S, EP), lambda i: (0, 0, 0)),   # x (whole batch)
            pl.BlockSpec((Bb, Tt, EP), lambda i: (0, 0, 0)),  # tag_embedding
            pl.BlockSpec((EP, EP), lambda i: (0, 0)),         # w1
            pl.BlockSpec((1, EP), lambda i: (0, 0)),          # b1
            pl.BlockSpec((EP, EP), lambda i: (0, 0)),         # w4
            pl.BlockSpec((1, EP), lambda i: (0, 0)),          # b4
            pl.BlockSpec((EP, Vv), lambda i: (0, 0)),         # fc2^T * scale
            pl.BlockSpec((EP, Vv), lambda i: (0, 0)),         # fc3^T * scale
        ],
        out_specs=pl.BlockSpec((Bb, Tt), lambda i: (0, 0)),
        compiler_params=pltpu.CompilerParams(dimension_semantics=("arbitrary",)),
    )(xp, tagp, w1p, b1p, w4p, b4p, fc2ts, fc3ts)
    return out


def mvke_reference(x, tag, params):
    """Pure-JAX reference matching the PyTorch forward."""
    w1, b1, w2, b2, w3, b3, w4, b4, vk = params
    scale = 1.0 / math.sqrt(DK)
    fc1 = x @ w1 + b1                                             # (B, S, E)
    fc2 = vk @ w2 + b2                                            # (V, E)
    m1 = jnp.einsum('bse,ve->bsv', fc1, fc2) * scale
    sign = jnp.sign(jnp.sum(jnp.abs(x), axis=2))[:, :, None]
    pad = jnp.float32(-2.0 ** 32 + 1.0)
    masked = jnp.where(jnp.broadcast_to(sign, m1.shape) == 0.0, pad, m1)
    sm1 = jax.nn.softmax(masked, axis=1)
    ws1 = jnp.einsum('bsv,bse->bve', sm1, fc1)                    # (B, V, E)
    fc3 = vk @ w3 + b3                                            # (V, E)
    fc4 = tag @ w4 + b4                                           # (B, T, E)
    m2 = jnp.einsum('bte,ve->btv', fc4, fc3) * scale
    sm2 = jax.nn.softmax(m2, axis=1)
    ws2 = jnp.einsum('btv,bve->bte', sm2, ws1)                    # (B, T, E)
    return jnp.sum(ws2 * tag, axis=2)                             # (B, T)


def init_params(key):
    ks = jax.random.split(key, 9)
    s = 1.0 / math.sqrt(E)
    w1 = jax.random.normal(ks[0], (E, E), jnp.float32) * s
    b1 = jax.random.normal(ks[1], (1, E), jnp.float32) * s
    w2 = jax.random.normal(ks[2], (E, E), jnp.float32) * s
    b2 = jax.random.normal(ks[3], (1, E), jnp.float32) * s
    w3 = jax.random.normal(ks[4], (E, E), jnp.float32) * s
    b3 = jax.random.normal(ks[5], (1, E), jnp.float32) * s
    w4 = jax.random.normal(ks[6], (E, E), jnp.float32) * s
    b4 = jax.random.normal(ks[7], (1, E), jnp.float32) * s
    vk = jax.random.uniform(ks[8], (V, E), jnp.float32)           # torch.rand(V, E)
    return (w1, b1, w2, b2, w3, b3, w4, b4, vk)


if __name__ == "__main__":
    key = jax.random.PRNGKey(0)
    kp, kx, kt = jax.random.split(key, 3)

    params = init_params(kp)

    x = jax.random.normal(kx, (B, C, E), jnp.float32)
    # zero out one field to exercise the padding/masking branch
    x = x.at[0, 1, :].set(0.0)
    tag_embedding = jax.random.normal(kt, (B, T, E), jnp.float32)

    out = mvke_forward(x, tag_embedding, params)
    out = jax.block_until_ready(out)

    ref = mvke_reference(x, tag_embedding, params)
    assert out.shape == (B, T)
    assert jnp.allclose(out, ref, rtol=1e-2, atol=1e-2), (out, ref)

    print("KERNEL_OK")
</pallas_src>

<mosaic_0001>
module attributes {stable_mosaic.version = 11 : i64} {
  func.func @mvke_kernel(%arg0: i32, %arg1: memref<2x4x128xf32, #tpu.memory_space<vmem>>, %arg2: memref<2x4x128xf32, #tpu.memory_space<vmem>>, %arg3: memref<128x128xf32, #tpu.memory_space<vmem>>, %arg4: memref<1x128xf32, #tpu.memory_space<vmem>>, %arg5: memref<128x128xf32, #tpu.memory_space<vmem>>, %arg6: memref<1x128xf32, #tpu.memory_space<vmem>>, %arg7: memref<128x3xf32, #tpu.memory_space<vmem>>, %arg8: memref<128x3xf32, #tpu.memory_space<vmem>>, %arg9: memref<2x4xf32, #tpu.memory_space<vmem>>) attributes {dimension_semantics = [#tpu.dimension_semantics<arbitrary>], iteration_bounds = array<i64: 1>, scalar_prefetch = 0 : i64, scratch_operands = 0 : i64, tpu.core_type = #tpu.core_type<tc>, window_params = [{pipeline_mode = #tpu.pipeline_mode<synchronous>, transform_indices = @transform_0, window_bounds = array<i64: 2, 4, 128>}, {pipeline_mode = #tpu.pipeline_mode<synchronous>, transform_indices = @transform_1, window_bounds = array<i64: 2, 4, 128>}, {pipeline_mode = #tpu.pipeline_mode<synchronous>, transform_indices = @transform_2, window_bounds = array<i64: 128, 128>}, {pipeline_mode = #tpu.pipeline_mode<synchronous>, transform_indices = @transform_3, window_bounds = array<i64: 1, 128>}, {pipeline_mode = #tpu.pipeline_mode<synchronous>, transform_indices = @transform_4, window_bounds = array<i64: 128, 128>}, {pipeline_mode = #tpu.pipeline_mode<synchronous>, transform_indices = @transform_5, window_bounds = array<i64: 1, 128>}, {pipeline_mode = #tpu.pipeline_mode<synchronous>, transform_indices = @transform_6, window_bounds = array<i64: 128, 3>}, {pipeline_mode = #tpu.pipeline_mode<synchronous>, transform_indices = @transform_7, window_bounds = array<i64: 128, 3>}, {pipeline_mode = #tpu.pipeline_mode<synchronous>, transform_indices = @transform_8, window_bounds = array<i64: 2, 4>}]} {
    %c0 = arith.constant 0 : index
    %c0_0 = arith.constant 0 : index
    %c0_1 = arith.constant 0 : index
    %0 = vector.load %arg1[%c0, %c0_0, %c0_1] : memref<2x4x128xf32, #tpu.memory_space<vmem>>, vector<2x4x128xf32>
    %c0_2 = arith.constant 0 : index
    %c0_3 = arith.constant 0 : index
    %c0_4 = arith.constant 0 : index
    %1 = vector.load %arg2[%c0_2, %c0_3, %c0_4] : memref<2x4x128xf32, #tpu.memory_space<vmem>>, vector<2x4x128xf32>
    %2 = vector.shape_cast %0 : vector<2x4x128xf32> to vector<8x128xf32>
    %3 = vector.shape_cast %1 : vector<2x4x128xf32> to vector<8x128xf32>
    %c0_5 = arith.constant 0 : index
    %c0_6 = arith.constant 0 : index
    %4 = vector.load %arg3[%c0_5, %c0_6] : memref<128x128xf32, #tpu.memory_space<vmem>>, vector<128x128xf32>
    %cst = arith.constant dense<0.000000e+00> : vector<8x128xf32>
    %5 = tpu.matmul %2, %4, %cst {dimension_numbers = #tpu.dot_dimension_numbers<[1], [0], [0], [1], [0, 0, 1, 1], [], []>} : vector<8x128xf32>, vector<128x128xf32>, vector<8x128xf32> -> vector<8x128xf32>
    %c0_7 = arith.constant 0 : index
    %c0_8 = arith.constant 0 : index
    %6 = vector.load %arg4[%c0_7, %c0_8] : memref<1x128xf32, #tpu.memory_space<vmem>>, vector<1x128xf32>
    %7 = vector.broadcast %6 : vector<1x128xf32> to vector<8x128xf32>
    %8 = arith.addf %5, %7 : vector<8x128xf32>
    %c0_9 = arith.constant 0 : index
    %c0_10 = arith.constant 0 : index
    %9 = vector.load %arg7[%c0_9, %c0_10] : memref<128x3xf32, #tpu.memory_space<vmem>>, vector<128x3xf32>
    %cst_11 = arith.constant dense<0.000000e+00> : vector<8x3xf32>
    %10 = tpu.matmul %8, %9, %cst_11 {dimension_numbers = #tpu.dot_dimension_numbers<[1], [0], [0], [1], [0, 0, 1, 1], [], []>} : vector<8x128xf32>, vector<128x3xf32>, vector<8x3xf32> -> vector<8x3xf32>
    %11 = math.absf %2 : vector<8x128xf32>
    %cst_12 = arith.constant dense<0.000000e+00> : vector<8xf32>
    %12 = vector.multi_reduction <add>, %11, %cst_12 [1] : vector<8x128xf32> to vector<8xf32>
    %13 = vector.shape_cast %12 : vector<8xf32> to vector<8x1xf32>
    %cst_13 = arith.constant 0.000000e+00 : f32
    %14 = vector.broadcast %cst_13 : f32 to vector<8x1xf32>
    %15 = arith.cmpf oeq, %13, %14 : vector<8x1xf32>
    %cst_14 = arith.constant -4.2949673E+9 : f32
    %16 = vector.shape_cast %15 : vector<8x1xi1> to vector<8x1xi1>
    %17 = vector.broadcast %16 : vector<8x1xi1> to vector<8x3xi1>
    %18 = vector.broadcast %cst_14 : f32 to vector<8x3xf32>
    %19 = arith.select %17, %18, %10 : vector<8x3xi1>, vector<8x3xf32>
    %20 = vector.shape_cast %19 : vector<8x3xf32> to vector<2x4x3xf32>
    %21 = vector.shape_cast %8 : vector<8x128xf32> to vector<2x4x128xf32>
    %cst_15 = arith.constant dense<0xFF800000> : vector<2x3xf32>
    %22 = vector.multi_reduction <maximumf>, %20, %cst_15 [1] : vector<2x4x3xf32> to vector<2x3xf32>
    %23 = vector.shape_cast %22 : vector<2x3xf32> to vector<2x1x3xf32>
    %24 = vector.broadcast %23 : vector<2x1x3xf32> to vector<2x4x3xf32>
    %25 = arith.subf %20, %24 : vector<2x4x3xf32>
    %26 = math.exp %25 : vector<2x4x3xf32>
    %cst_16 = arith.constant dense<0.000000e+00> : vector<2x3xf32>
    %27 = vector.multi_reduction <add>, %26, %cst_16 [1] : vector<2x4x3xf32> to vector<2x3xf32>
    %28 = vector.shape_cast %27 : vector<2x3xf32> to vector<2x1x3xf32>
    %29 = vector.broadcast %28 : vector<2x1x3xf32> to vector<2x4x3xf32>
    %30 = arith.divf %26, %29 : vector<2x4x3xf32>
    %31 = vector.extract_strided_slice %30 {offsets = [0, 0, 0], sizes = [2, 1, 3], strides = [1, 1, 1]} : vector<2x4x3xf32> to vector<2x1x3xf32>
    %32 = vector.shape_cast %31 : vector<2x1x3xf32> to vector<2x3xf32>
    %33 = vector.shape_cast %32 : vector<2x3xf32> to vector<2x3x1xf32>
    %34 = vector.extract_strided_slice %21 {offsets = [0, 0, 0], sizes = [2, 1, 128], strides = [1, 1, 1]} : vector<2x4x128xf32> to vector<2x1x128xf32>
    %35 = vector.shape_cast %34 : vector<2x1x128xf32> to vector<2x128xf32>
    %36 = vector.shape_cast %35 : vector<2x128xf32> to vector<2x1x128xf32>
    %37 = vector.broadcast %33 : vector<2x3x1xf32> to vector<2x3x128xf32>
    %38 = vector.broadcast %36 : vector<2x1x128xf32> to vector<2x3x128xf32>
    %39 = arith.mulf %37, %38 : vector<2x3x128xf32>
    %40 = vector.extract_strided_slice %30 {offsets = [0, 1, 0], sizes = [2, 1, 3], strides = [1, 1, 1]} : vector<2x4x3xf32> to vector<2x1x3xf32>
    %41 = vector.shape_cast %40 : vector<2x1x3xf32> to vector<2x3xf32>
    %42 = vector.shape_cast %41 : vector<2x3xf32> to vector<2x3x1xf32>
    %43 = vector.extract_strided_slice %21 {offsets = [0, 1, 0], sizes = [2, 1, 128], strides = [1, 1, 1]} : vector<2x4x128xf32> to vector<2x1x128xf32>
    %44 = vector.shape_cast %43 : vector<2x1x128xf32> to vector<2x128xf32>
    %45 = vector.shape_cast %44 : vector<2x128xf32> to vector<2x1x128xf32>
    %46 = vector.broadcast %42 : vector<2x3x1xf32> to vector<2x3x128xf32>
    %47 = vector.broadcast %45 : vector<2x1x128xf32> to vector<2x3x128xf32>
    %48 = arith.mulf %46, %47 : vector<2x3x128xf32>
    %49 = arith.addf %39, %48 : vector<2x3x128xf32>
    %50 = vector.extract_strided_slice %30 {offsets = [0, 2, 0], sizes = [2, 1, 3], strides = [1, 1, 1]} : vector<2x4x3xf32> to vector<2x1x3xf32>
    %51 = vector.shape_cast %50 : vector<2x1x3xf32> to vector<2x3xf32>
    %52 = vector.shape_cast %51 : vector<2x3xf32> to vector<2x3x1xf32>
    %53 = vector.extract_strided_slice %21 {offsets = [0, 2, 0], sizes = [2, 1, 128], strides = [1, 1, 1]} : vector<2x4x128xf32> to vector<2x1x128xf32>
    %54 = vector.shape_cast %53 : vector<2x1x128xf32> to vector<2x128xf32>
    %55 = vector.shape_cast %54 : vector<2x128xf32> to vector<2x1x128xf32>
    %56 = vector.broadcast %52 : vector<2x3x1xf32> to vector<2x3x128xf32>
    %57 = vector.broadcast %55 : vector<2x1x128xf32> to vector<2x3x128xf32>
    %58 = arith.mulf %56, %57 : vector<2x3x128xf32>
    %59 = arith.addf %49, %58 : vector<2x3x128xf32>
    %60 = vector.extract_strided_slice %30 {offsets = [0, 3, 0], sizes = [2, 1, 3], strides = [1, 1, 1]} : vector<2x4x3xf32> to vector<2x1x3xf32>
    %61 = vector.shape_cast %60 : vector<2x1x3xf32> to vector<2x3xf32>
    %62 = vector.shape_cast %61 : vector<2x3xf32> to vector<2x3x1xf32>
    %63 = vector.extract_strided_slice %21 {offsets = [0, 3, 0], sizes = [2, 1, 128], strides = [1, 1, 1]} : vector<2x4x128xf32> to vector<2x1x128xf32>
    %64 = vector.shape_cast %63 : vector<2x1x128xf32> to vector<2x128xf32>
    %65 = vector.shape_cast %64 : vector<2x128xf32> to vector<2x1x128xf32>
    %66 = vector.broadcast %62 : vector<2x3x1xf32> to vector<2x3x128xf32>
    %67 = vector.broadcast %65 : vector<2x1x128xf32> to vector<2x3x128xf32>
    %68 = arith.mulf %66, %67 : vector<2x3x128xf32>
    %69 = arith.addf %59, %68 : vector<2x3x128xf32>
    %c0_17 = arith.constant 0 : index
    %c0_18 = arith.constant 0 : index
    %70 = vector.load %arg5[%c0_17, %c0_18] : memref<128x128xf32, #tpu.memory_space<vmem>>, vector<128x128xf32>
    %cst_19 = arith.constant dense<0.000000e+00> : vector<8x128xf32>
    %71 = tpu.matmul %3, %70, %cst_19 {dimension_numbers = #tpu.dot_dimension_numbers<[1], [0], [0], [1], [0, 0, 1, 1], [], []>} : vector<8x128xf32>, vector<128x128xf32>, vector<8x128xf32> -> vector<8x128xf32>
    %c0_20 = arith.constant 0 : index
    %c0_21 = arith.constant 0 : index
    %72 = vector.load %arg6[%c0_20, %c0_21] : memref<1x128xf32, #tpu.memory_space<vmem>>, vector<1x128xf32>
    %73 = vector.broadcast %72 : vector<1x128xf32> to vector<8x128xf32>
    %74 = arith.addf %71, %73 : vector<8x128xf32>
    %c0_22 = arith.constant 0 : index
    %c0_23 = arith.constant 0 : index
    %75 = vector.load %arg8[%c0_22, %c0_23] : memref<128x3xf32, #tpu.memory_space<vmem>>, vector<128x3xf32>
    %cst_24 = arith.constant dense<0.000000e+00> : vector<8x3xf32>
    %76 = tpu.matmul %74, %75, %cst_24 {dimension_numbers = #tpu.dot_dimension_numbers<[1], [0], [0], [1], [0, 0, 1, 1], [], []>} : vector<8x128xf32>, vector<128x3xf32>, vector<8x3xf32> -> vector<8x3xf32>
    %77 = vector.shape_cast %76 : vector<8x3xf32> to vector<2x4x3xf32>
    %cst_25 = arith.constant dense<0xFF800000> : vector<2x3xf32>
    %78 = vector.multi_reduction <maximumf>, %77, %cst_25 [1] : vector<2x4x3xf32> to vector<2x3xf32>
    %79 = vector.shape_cast %78 : vector<2x3xf32> to vector<2x1x3xf32>
    %80 = vector.broadcast %79 : vector<2x1x3xf32> to vector<2x4x3xf32>
    %81 = arith.subf %77, %80 : vector<2x4x3xf32>
    %82 = math.exp %81 : vector<2x4x3xf32>
    %cst_26 = arith.constant dense<0.000000e+00> : vector<2x3xf32>
    %83 = vector.multi_reduction <add>, %82, %cst_26 [1] : vector<2x4x3xf32> to vector<2x3xf32>
    %84 = vector.shape_cast %83 : vector<2x3xf32> to vector<2x1x3xf32>
    %85 = vector.broadcast %84 : vector<2x1x3xf32> to vector<2x4x3xf32>
    %86 = arith.divf %82, %85 : vector<2x4x3xf32>
    %87 = vector.extract_strided_slice %86 {offsets = [0, 0, 0], sizes = [2, 4, 1], strides = [1, 1, 1]} : vector<2x4x3xf32> to vector<2x4x1xf32>
    %88 = vector.shape_cast %87 : vector<2x4x1xf32> to vector<2x4xf32>
    %89 = vector.shape_cast %88 : vector<2x4xf32> to vector<2x4x1xf32>
    %90 = vector.extract_strided_slice %69 {offsets = [0, 0, 0], sizes = [2, 1, 128], strides = [1, 1, 1]} : vector<2x3x128xf32> to vector<2x1x128xf32>
    %91 = vector.shape_cast %90 : vector<2x1x128xf32> to vector<2x128xf32>
    %92 = vector.shape_cast %91 : vector<2x128xf32> to vector<2x1x128xf32>
    %93 = vector.broadcast %89 : vector<2x4x1xf32> to vector<2x4x128xf32>
    %94 = vector.broadcast %92 : vector<2x1x128xf32> to vector<2x4x128xf32>
    %95 = arith.mulf %93, %94 : vector<2x4x128xf32>
    %96 = vector.extract_strided_slice %86 {offsets = [0, 0, 1], sizes = [2, 4, 1], strides = [1, 1, 1]} : vector<2x4x3xf32> to vector<2x4x1xf32>
    %97 = vector.shape_cast %96 : vector<2x4x1xf32> to vector<2x4xf32>
    %98 = vector.shape_cast %97 : vector<2x4xf32> to vector<2x4x1xf32>
    %99 = vector.extract_strided_slice %69 {offsets = [0, 1, 0], sizes = [2, 1, 128], strides = [1, 1, 1]} : vector<2x3x128xf32> to vector<2x1x128xf32>
    %100 = vector.shape_cast %99 : vector<2x1x128xf32> to vector<2x128xf32>
    %101 = vector.shape_cast %100 : vector<2x128xf32> to vector<2x1x128xf32>
    %102 = vector.broadcast %98 : vector<2x4x1xf32> to vector<2x4x128xf32>
    %103 = vector.broadcast %101 : vector<2x1x128xf32> to vector<2x4x128xf32>
    %104 = arith.mulf %102, %103 : vector<2x4x128xf32>
    %105 = arith.addf %95, %104 : vector<2x4x128xf32>
    %106 = vector.extract_strided_slice %86 {offsets = [0, 0, 2], sizes = [2, 4, 1], strides = [1, 1, 1]} : vector<2x4x3xf32> to vector<2x4x1xf32>
    %107 = vector.shape_cast %106 : vector<2x4x1xf32> to vector<2x4xf32>
    %108 = vector.shape_cast %107 : vector<2x4xf32> to vector<2x4x1xf32>
    %109 = vector.extract_strided_slice %69 {offsets = [0, 2, 0], sizes = [2, 1, 128], strides = [1, 1, 1]} : vector<2x3x128xf32> to vector<2x1x128xf32>
    %110 = vector.shape_cast %109 : vector<2x1x128xf32> to vector<2x128xf32>
    %111 = vector.shape_cast %110 : vector<2x128xf32> to vector<2x1x128xf32>
    %112 = vector.broadcast %108 : vector<2x4x1xf32> to vector<2x4x128xf32>
    %113 = vector.broadcast %111 : vector<2x1x128xf32> to vector<2x4x128xf32>
    %114 = arith.mulf %112, %113 : vector<2x4x128xf32>
    %115 = arith.addf %105, %114 : vector<2x4x128xf32>
    %116 = arith.mulf %115, %1 : vector<2x4x128xf32>
    %cst_27 = arith.constant dense<0.000000e+00> : vector<2x4xf32>
    %117 = vector.multi_reduction <add>, %116, %cst_27 [2] : vector<2x4x128xf32> to vector<2x4xf32>
    %c0_28 = arith.constant 0 : index
    %c0_29 = arith.constant 0 : index
    %118 = vector.load %arg9[%c0_28, %c0_29] : memref<2x4xf32, #tpu.memory_space<vmem>>, vector<2x4xf32>
    tpu.vector_store %arg9[%c0_28, %c0_29], %117 {strides = array<i32>} : memref<2x4xf32, #tpu.memory_space<vmem>>, vector<2x4xf32>,
    return
  }
  func.func @transform_0(%arg0: i32) -> (i32, i32, i32) {
    %c0_i32 = arith.constant 0 : i32
    %c0_i32_0 = arith.constant 0 : i32
    %c0_i32_1 = arith.constant 0 : i32
    %c0_i32_2 = arith.constant 0 : i32
    return %c0_i32, %c0_i32_0, %c0_i32_1 : i32, i32, i32
  }
  func.func @transform_1(%arg0: i32) -> (i32, i32, i32) {
    %c0_i32 = arith.constant 0 : i32
    %c0_i32_0 = arith.constant 0 : i32
    %c0_i32_1 = arith.constant 0 : i32
    %c0_i32_2 = arith.constant 0 : i32
    return %c0_i32, %c0_i32_0, %c0_i32_1 : i32, i32, i32
  }
  func.func @transform_2(%arg0: i32) -> (i32, i32) {
    %c0_i32 = arith.constant 0 : i32
    %c0_i32_0 = arith.constant 0 : i32
    %c0_i32_1 = arith.constant 0 : i32
    return %c0_i32, %c0_i32_0 : i32, i32
  }
  func.func @transform_3(%arg0: i32) -> (i32, i32) {
    %c0_i32 = arith.constant 0 : i32
    %c0_i32_0 = arith.constant 0 : i32
    %c0_i32_1 = arith.constant 0 : i32
    return %c0_i32, %c0_i32_0 : i32, i32
  }
  func.func @transform_4(%arg0: i32) -> (i32, i32) {
    %c0_i32 = arith.constant 0 : i32
    %c0_i32_0 = arith.constant 0 : i32
    %c0_i32_1 = arith.constant 0 : i32
    return %c0_i32, %c0_i32_0 : i32, i32
  }
  func.func @transform_5(%arg0: i32) -> (i32, i32) {
    %c0_i32 = arith.constant 0 : i32
    %c0_i32_0 = arith.constant 0 : i32
    %c0_i32_1 = arith.constant 0 : i32
    return %c0_i32, %c0_i32_0 : i32, i32
  }
  func.func @transform_6(%arg0: i32) -> (i32, i32) {
    %c0_i32 = arith.constant 0 : i32
    %c0_i32_0 = arith.constant 0 : i32
    %c0_i32_1 = arith.constant 0 : i32
    return %c0_i32, %c0_i32_0 : i32, i32
  }
  func.func @transform_7(%arg0: i32) -> (i32, i32) {
    %c0_i32 = arith.constant 0 : i32
    %c0_i32_0 = arith.constant 0 : i32
    %c0_i32_1 = arith.constant 0 : i32
    return %c0_i32, %c0_i32_0 : i32, i32
  }
  func.func @transform_8(%arg0: i32) -> (i32, i32) {
    %c0_i32 = arith.constant 0 : i32
    %c0_i32_0 = arith.constant 0 : i32
    %c0_i32_1 = arith.constant 0 : i32
    return %c0_i32, %c0_i32_0 : i32, i32
  }
}

</mosaic_0001>

<llo_original>
// kernel: tpu_custom_call.1
$region0: #{tpu_custom_call.1}
  #allocation0 [shape = 'u32[]', space=smem, size = 0x4, offset = 0x4, fixed_abs, tag = 'smem constant byte address 0x4 - core index']
  #allocation1 [shape = 'u32[144,128]{1,0:T(1,128)}', space=vmem, size = 0x12000, scoped, tag = 'internal scratch']
  %s0 = inlined_call_operand.vmem [shape: f32[2,4,128], index: 0, kind: input, shape index: {}]
  %s1 = inlined_call_operand.hbm [shape: f32[2,4,128], index: 1, kind: input, shape index: {}]
  %s2 = inlined_call_operand.vmem [shape: f32[128,128], index: 2, kind: input, shape index: {}]
  %s3 = inlined_call_operand.vmem [shape: f32[1,128], index: 3, kind: input, shape index: {}]
  %s4 = inlined_call_operand.vmem [shape: f32[128,128], index: 4, kind: input, shape index: {}]
  %s5 = inlined_call_operand.vmem [shape: f32[1,128], index: 5, kind: input, shape index: {}]
  %s6 = inlined_call_operand.vmem [shape: f32[128,3], index: 6, kind: input, shape index: {}]
  %s7 = inlined_call_operand.vmem [shape: f32[128,3], index: 7, kind: input, shape index: {}]
  %s8 = inlined_call_operand.hbm [shape: f32[2,4], index: 8, kind: output, shape index: {}]
  %s9 = sld [smem:[#allocation0]]
  $region46: #{tpu_custom_call.1} parent=0
    _
  %s11 = ssub.s32 1, %s9
  %s12 = scalar_select 0, %s11, %s9
  $region1: #{tpu_custom_call.1} parent=0
    #allocation2 [shape = 'u8[4096]{0}', space=vmem, size = 0x1000, scoped, tag = 'input window, operand 1, single buffered']
    #allocation3 [shape = 's32[1]{0}', space=sflag, size = 0x4, scoped, tag = 'scoped memory for tpu_custom_call.1']
    #allocation4 [shape = 's32[1]{0}', space=sflag, size = 0x4, scoped, tag = 'scoped memory for tpu_custom_call.1']
    #allocation5 [shape = 'u8[1024]{0}', space=vmem, size = 0x400, scoped, tag = 'output window, operand 0, single buffered']
    %13 = vsyncpa [#allocation3], 0
    %14 = vsyncpa [#allocation4], 0
    // Predicated region
    $region2: #{tpu_custom_call.1} parent=1 // pred_check
      _
    $region3: #{tpu_custom_call.1} parent=1 // pred_check_branch
      %16 = sbr.rel (0) target = $region5
    $region4: #{tpu_custom_call.1} parent=1 // pred_region
      _
    $region5: #{tpu_custom_call.1} parent=1 // pred_fallthru
      _
    // Predicated region
    $region6: #{tpu_custom_call.1} parent=1 // pred_check
      _
    $region7: #{tpu_custom_call.1} parent=1 // pred_check_branch
      %18 = sbr.rel (0) target = $region9
    $region8: #{tpu_custom_call.1} parent=1 // pred_region
      %s20 = ssub.s32 128, 128
      %21 = vsyncadd [#allocation3], %s20
      %s22 = sshll.u32 [#allocation2], 4
      %s23 = int_to_ptr.vmem [resolvable:$true] %s22
      %28 = dma.hbm_to_vmem [thread:$0]  %s1, 128, %s23, [#allocation3], 64, 64, 4
    $region9: #{tpu_custom_call.1} parent=1 // pred_fallthru
      _
    // Predicated region
    $region10: #{tpu_custom_call.1} parent=1 // pred_check
      _
    $region11: #{tpu_custom_call.1} parent=1 // pred_check_branch
      %30 = sbr.rel (0) target = $region13
    $region12: #{tpu_custom_call.1} parent=1 // pred_region
      _
    $region13: #{tpu_custom_call.1} parent=1 // pred_fallthru
      _
    // Predicated region
    $region14: #{tpu_custom_call.1} parent=1 // pred_check
      _
    $region15: #{tpu_custom_call.1} parent=1 // pred_check_branch
      %32 = sbr.rel (0) target = $region17
    $region16: #{tpu_custom_call.1} parent=1 // pred_region
      _
    $region17: #{tpu_custom_call.1} parent=1 // pred_fallthru
      _
    // Predicated region
    $region18: #{tpu_custom_call.1} parent=1 // pred_check
      _
    $region19: #{tpu_custom_call.1} parent=1 // pred_check_branch
      %34 = sbr.rel (0) target = $region21
    $region20: #{tpu_custom_call.1} parent=1 // pred_region
      _
    $region21: #{tpu_custom_call.1} parent=1 // pred_fallthru
      _
    // Predicated region
    $region22: #{tpu_custom_call.1} parent=1 // pred_check
      _
    $region23: #{tpu_custom_call.1} parent=1 // pred_check_branch
      %36 = sbr.rel (0) target = $region25
    $region24: #{tpu_custom_call.1} parent=1 // pred_region
      _
    $region25: #{tpu_custom_call.1} parent=1 // pred_fallthru
      _
    // Predicated region
    $region26: #{tpu_custom_call.1} parent=1 // pred_check
      _
    $region27: #{tpu_custom_call.1} parent=1 // pred_check_branch
      %38 = sbr.rel (0) target = $region29
    $region28: #{tpu_custom_call.1} parent=1 // pred_region
      _
    $region29: #{tpu_custom_call.1} parent=1 // pred_fallthru
      _
    // Predicated region
    $region30: #{tpu_custom_call.1} parent=1 // pred_check
      _
    $region31: #{tpu_custom_call.1} parent=1 // pred_check_branch
      %40 = sbr.rel (0) target = $region33
    $region32: #{tpu_custom_call.1} parent=1 // pred_region
      _
    $region33: #{tpu_custom_call.1} parent=1 // pred_fallthru
      _
    // Predicated region
    $region34: #{tpu_custom_call.1} parent=1 // pred_check
      _
    $region35: #{tpu_custom_call.1} parent=1 // pred_check_branch
      %42 = sbr.rel (0) target = $region37
    $region36: #{tpu_custom_call.1} parent=1 // pred_region
      %43 = dma.done [#allocation3], 128
    $region37: #{tpu_custom_call.1} parent=1 // pred_fallthru
      _
    %v44 = vld [vmem:[%s0] sm:$0xf]
    %v45 = vld [vmem:[%s0 + $0x4] sm:$0xf]
    %v46 = vld [vmem:[#allocation2] sm:$0xf]
    %v47 = vld [vmem:[#allocation2 + $0x4] sm:$0xf]
    %v48 = vld [vmem:[%s2] sm:$0xff]
    %v49 = vld [vmem:[%s2 + $0x8] sm:$0xff]
    %v50 = vld [vmem:[%s2 + $0x10] sm:$0xff]
    %v51 = vld [vmem:[%s2 + $0x18] sm:$0xff]
    %v52 = vld [vmem:[%s2 + $0x20] sm:$0xff]
    %v53 = vld [vmem:[%s2 + $0x28] sm:$0xff]
    %v54 = vld [vmem:[%s2 + $0x30] sm:$0xff]
    %v55 = vld [vmem:[%s2 + $0x38] sm:$0xff]
    %v56 = vld [vmem:[%s2 + $0x40] sm:$0xff]
    %v57 = vld [vmem:[%s2 + $0x48] sm:$0xff]
    %v58 = vld [vmem:[%s2 + $0x50] sm:$0xff]
    %v59 = vld [vmem:[%s2 + $0x58] sm:$0xff]
    %v60 = vld [vmem:[%s2 + $0x60] sm:$0xff]
    %v61 = vld [vmem:[%s2 + $0x68] sm:$0xff]
    %v62 = vld [vmem:[%s2 + $0x70] sm:$0xff]
    %v63 = vld [vmem:[%s2 + $0x78] sm:$0xff]
    %v64 = vld [vmem:[%s3] sm:$0x1]
    %v66 = vlaneseq
    %v67 = vshrl.u32 %v66, 7
    %v68 = vsub.s32 0, %v67
    %v69 = vrot.slane %v64, %v68
    %v73 = vcombine.low %v44, %v45
    %75 = vmatprep.subr.mxu0 0.0
    %76 = vmatpush1.msra.mxu0 %v48
    %77 = vmatprep.subr.mxu0 0.0
    %78 = vmatpush1.msra.mxu0 %v49
    %79 = vmatprep.subr.mxu0 0.0
    %80 = vmatpush1.msra.mxu0 %v50
    %81 = vmatprep.subr.mxu0 0.0
    %82 = vmatpush1.msra.mxu0 %v51
    %83 = vmatprep.subr.mxu0 0.0
    %84 = vmatpush1.msra.mxu0 %v52
    %85 = vmatprep.subr.mxu0 0.0
    %86 = vmatpush1.msra.mxu0 %v53
    %87 = vmatprep.subr.mxu0 0.0
    %88 = vmatpush1.msra.mxu0 %v54
    %89 = vmatprep.subr.mxu0 0.0
    %90 = vmatpush1.msra.mxu0 %v55
    %91 = vmatprep.subr.mxu0 0.0
    %92 = vmatpush1.msra.mxu0 %v56
    %93 = vmatprep.subr.mxu0 0.0
    %94 = vmatpush1.msra.mxu0 %v57
    %95 = vmatprep.subr.mxu0 0.0
    %96 = vmatpush1.msra.mxu0 %v58
    %97 = vmatprep.subr.mxu0 0.0
    %98 = vmatpush1.msra.mxu0 %v59
    %99 = vmatprep.subr.mxu0 0.0
    %100 = vmatpush1.msra.mxu0 %v60
    %101 = vmatprep.subr.mxu0 0.0
    %102 = vmatpush1.msra.mxu0 %v61
    %103 = vmatprep.subr.mxu0 0.0
    %104 = vmatpush1.msra.mxu0 %v62
    %105 = vmatprep.subr.mxu0 0.0
    %106 = vmatpush1.msra.mxu0 %v63
    %107 = vmatprep.subr.mxu0 0.0
    %108 = vmatpush1.msra.mxu0 0.0
    %109 = vmatprep.subr.mxu0 0.0
    %110 = vmatpush1.msra.mxu0 0.0
    %111 = vmatprep.subr.mxu0 0.0
    %112 = vmatpush1.msra.mxu0 0.0
    %113 = vmatprep.subr.mxu0 0.0
    %114 = vmatpush1.msra.mxu0 0.0
    %115 = vmatprep.subr.mxu0 0.0
    %116 = vmatpush1.msra.mxu0 0.0
    %117 = vmatprep.subr.mxu0 0.0
    %118 = vmatpush1.msra.mxu0 0.0
    %119 = vmatprep.subr.mxu0 0.0
    %120 = vmatpush1.msra.mxu0 0.0
    %121 = vmatprep.subr.mxu0 0.0
    %122 = vmatpush1.msra.mxu0 0.0
    %123 = vmatprep.subr.mxu0 0.0
    %124 = vmatpush1.msra.mxu0 0.0
    %125 = vmatprep.subr.mxu0 0.0
    %126 = vmatpush1.msra.mxu0 0.0
    %127 = vmatprep.subr.mxu0 0.0
    %128 = vmatpush1.msra.mxu0 0.0
    %129 = vmatprep.subr.mxu0 0.0
    %130 = vmatpush1.msra.mxu0 0.0
    %131 = vmatprep.subr.mxu0 0.0
    %132 = vmatpush1.msra.mxu0 0.0
    %133 = vmatprep.subr.mxu0 0.0
    %134 = vmatpush1.msra.mxu0 0.0
    %135 = vmatprep.subr.mxu0 0.0
    %136 = vmatpush1.msra.mxu0 0.0
    %137 = vmatprep.subr.mxu0 0.0
    %138 = vmatpush1.msra.mxu0 0.0
    %139 = vmatprep.mubr.f32.mxu0 0.0
    %140 = vmatmul.mubr.f32.gmra.mrb[0].mxu0 %v73
    %v141 = vpop.f32.mrb[0].mxu0
    %v142 = vadd.f32 %v69, %v141
    %v143 = vpop.f32.mrb[0].mxu0
    %144 = vdwg.mxu0
    %v145 = vld [vmem:[%s6] sm:$0xff]
    %v146 = vld [vmem:[%s6 + $0x8] sm:$0xff]
    %v147 = vld [vmem:[%s6 + $0x10] sm:$0xff]
    %v148 = vld [vmem:[%s6 + $0x18] sm:$0xff]
    %v149 = vld [vmem:[%s6 + $0x20] sm:$0xff]
    %v150 = vld [vmem:[%s6 + $0x28] sm:$0xff]
    %v151 = vld [vmem:[%s6 + $0x30] sm:$0xff]
    %v152 = vld [vmem:[%s6 + $0x38] sm:$0xff]
    %v153 = vld [vmem:[%s6 + $0x40] sm:$0xff]
    %v154 = vld [vmem:[%s6 + $0x48] sm:$0xff]
    %v155 = vld [vmem:[%s6 + $0x50] sm:$0xff]
    %v156 = vld [vmem:[%s6 + $0x58] sm:$0xff]
    %v157 = vld [vmem:[%s6 + $0x60] sm:$0xff]
    %v158 = vld [vmem:[%s6 + $0x68] sm:$0xff]
    %v159 = vld [vmem:[%s6 + $0x70] sm:$0xff]
    %v160 = vld [vmem:[%s6 + $0x78] sm:$0xff]
    %161 = vmatprep.subr.mxu0 0.0
    %162 = vmatpush1.msra.mxu0 %v145
    %163 = vmatprep.subr.mxu0 0.0
    %164 = vmatpush1.msra.mxu0 %v146
    %165 = vmatprep.subr.mxu0 0.0
    %166 = vmatpush1.msra.mxu0 %v147
    %167 = vmatprep.subr.mxu0 0.0
    %168 = vmatpush1.msra.mxu0 %v148
    %169 = vmatprep.subr.mxu0 0.0
    %170 = vmatpush1.msra.mxu0 %v149
    %171 = vmatprep.subr.mxu0 0.0
    %172 = vmatpush1.msra.mxu0 %v150
    %173 = vmatprep.subr.mxu0 0.0
    %174 = vmatpush1.msra.mxu0 %v151
    %175 = vmatprep.subr.mxu0 0.0
    %176 = vmatpush1.msra.mxu0 %v152
    %177 = vmatprep.subr.mxu0 0.0
    %178 = vmatpush1.msra.mxu0 %v153
    %179 = vmatprep.subr.mxu0 0.0
    %180 = vmatpush1.msra.mxu0 %v154
    %181 = vmatprep.subr.mxu0 0.0
    %182 = vmatpush1.msra.mxu0 %v155
    %183 = vmatprep.subr.mxu0 0.0
    %184 = vmatpush1.msra.mxu0 %v156
    %185 = vmatprep.subr.mxu0 0.0
    %186 = vmatpush1.msra.mxu0 %v157
    %187 = vmatprep.subr.mxu0 0.0
    %188 = vmatpush1.msra.mxu0 %v158
    %189 = vmatprep.subr.mxu0 0.0
    %190 = vmatpush1.msra.mxu0 %v159
    %191 = vmatprep.subr.mxu0 0.0
    %192 = vmatpush1.msra.mxu0 %v160
    %193 = vmatprep.subr.mxu0 0.0
    %194 = vmatpush1.msra.mxu0 0.0
    %195 = vmatprep.subr.mxu0 0.0
    %196 = vmatpush1.msra.mxu0 0.0
    %197 = vmatprep.subr.mxu0 0.0
    %198 = vmatpush1.msra.mxu0 0.0
    %199 = vmatprep.subr.mxu0 0.0
    %200 = vmatpush1.msra.mxu0 0.0
    %201 = vmatprep.subr.mxu0 0.0
    %202 = vmatpush1.msra.mxu0 0.0
    %203 = vmatprep.subr.mxu0 0.0
    %204 = vmatpush1.msra.mxu0 0.0
    %205 = vmatprep.subr.mxu0 0.0
    %206 = vmatpush1.msra.mxu0 0.0
    %207 = vmatprep.subr.mxu0 0.0
    %208 = vmatpush1.msra.mxu0 0.0
    %209 = vmatprep.subr.mxu0 0.0
    %210 = vmatpush1.msra.mxu0 0.0
    %211 = vmatprep.subr.mxu0 0.0
    %212 = vmatpush1.msra.mxu0 0.0
    %213 = vmatprep.subr.mxu0 0.0
    %214 = vmatpush1.msra.mxu0 0.0
    %215 = vmatprep.subr.mxu0 0.0
    %216 = vmatpush1.msra.mxu0 0.0
    %217 = vmatprep.subr.mxu0 0.0
    %218 = vmatpush1.msra.mxu0 0.0
    %219 = vmatprep.subr.mxu0 0.0
    %220 = vmatpush1.msra.mxu0 0.0
    %221 = vmatprep.subr.mxu0 0.0
    %222 = vmatpush1.msra.mxu0 0.0
    %223 = vmatprep.subr.mxu0 0.0
    %224 = vmatpush1.msra.mxu0 0.0
    %225 = vmatprep.mubr.f32.mxu0 0.0
    %226 = vmatmul.mubr.f32.gmra.mrb[0].mxu0 %v142
    %v227 = vpop.f32.mrb[0].mxu0
    %v228 = vadd.f32 0.0, %v227
    %v229 = vpop.f32.mrb[0].mxu0
    %230 = vdwg.mxu0
    %v231 = vand.u32 2147483647, %v44
    %v232 = vand.u32 2147483647, %v45
    %v235 = vcombine.low %v231, %v232
    %237 = vadd.xlane.f32.xlu0 %v235
    %v238 = vpop.xlane.xlu0 %237
    %vm239 = vcmp.eq.f32.partialorder %v238, 0.0
    %v240 = vsel %vm239, 1, 0
    %vm241 = vcmp.eq.s32.totalorder %v240, 1
    %v242 = vsel %vm241, -4.2949673e+09, %v228
    %v244 = vcombine.high %v242, %v242
    %v247 = vcombine.high %v142, %v142
    %vm249 = vcmask 19456
    %v250 = vsel %vm249, %v242, -inf
    %v251 = vrot.slane %v250, 4
    %v252 = vmax.f32 %v250, %v251
    %v253 = vrot.slane %v252, 2
    %v254 = vmax.f32 %v252, %v253
    %v255 = vrot.slane %v254, 1
    %v256 = vmax.f32 %v254, %v255
    %v257 = vsel %vm249, %v244, -inf
    %v258 = vrot.slane %v257, 4
    %v259 = vmax.f32 %v257, %v258
    %v260 = vrot.slane %v259, 2
    %v261 = vmax.f32 %v259, %v260
    %v262 = vrot.slane %v261, 1
    %v263 = vmax.f32 %v261, %v262
    %v264 = vsub.f32 %v242, %v256
    %v265 = vsub.f32 %v244, %v263
    %v266 = vmul.f32 %v264, 1.442695
    %v267 = vpow.pop %v266
    %v268 = vmul.f32 %v265, 1.442695
    %v269 = vpow.pop %v268
    %v270 = vsel %vm249, %v267, 0.0
    %v271 = vrot.slane %v270, 4
    %v272 = vadd.f32 %v270, %v271
    %v273 = vrot.slane %v272, 2
    %v274 = vadd.f32 %v272, %v273
    %v275 = vrot.slane %v274, 1
    %v276 = vadd.f32 %v274, %v275
    %v277 = vsel %vm249, %v269, 0.0
    %v278 = vrot.slane %v277, 4
    %v279 = vadd.f32 %v277, %v278
    %v280 = vrot.slane %v279, 2
    %v281 = vadd.f32 %v279, %v280
    %v282 = vrot.slane %v281, 1
    %v283 = vadd.f32 %v281, %v282
    %v284 = vrcp.pop %v276
    %v285 = vmul.f32 %v267, %v284
    %v286 = vrcp.pop %v283
    %v287 = vmul.f32 %v269, %v286
    %v288 = vlaneseq
    %v289 = vshrl.u32 %v288, 7
    %v290 = vsub.s32 0, %v289
    %v291 = vrot.slane %v285, %v290
    %293 = vbcast.lane.b32.xlu0 %v291, 256
    %v294 = vpop.permute.xlu0 %293
    %v295 = vlaneseq
    %v296 = vshrl.u32 %v295, 7
    %v297 = vsub.s32 0, %v296
    %v298 = vrot.slane %v287, %v297
    %300 = vbcast.lane.b32.xlu0 %v298, 256
    %v301 = vpop.permute.xlu0 %300
    %v302 = vlaneseq
    %v303 = vshrl.u32 %v302, 7
    %v304 = vsub.s32 0, %v303
    %v305 = vrot.slane %v142, %v304
    %v306 = vlaneseq
    %v307 = vshrl.u32 %v306, 7
    %v308 = vsub.s32 0, %v307
    %v309 = vrot.slane %v247, %v308
    %v310 = vmul.f32 %v294, %v305
    %v311 = vmul.f32 %v301, %v309
    %v312 = vlaneseq
    %v313 = vshrl.u32 %v312, 7
    %v314 = vsub.s32 1, %v313
    %v315 = vrot.slane %v285, %v314
    %317 = vbcast.lane.b32.xlu0 %v315, 256
    %v318 = vpop.permute.xlu0 %317
    %v319 = vlaneseq
    %v320 = vshrl.u32 %v319, 7
    %v321 = vsub.s32 1, %v320
    %v322 = vrot.slane %v287, %v321
    %324 = vbcast.lane.b32.xlu0 %v322, 256
    %v325 = vpop.permute.xlu0 %324
    %v326 = vlaneseq
    %v327 = vshrl.u32 %v326, 7
    %v328 = vsub.s32 1, %v327
    %v329 = vrot.slane %v142, %v328
    %v330 = vlaneseq
    %v331 = vshrl.u32 %v330, 7
    %v332 = vsub.s32 1, %v331
    %v333 = vrot.slane %v247, %v332
    %v334 = vmul.f32 %v318, %v329
    %v335 = vmul.f32 %v325, %v333
    %v336 = vadd.f32 %v310, %v334
    %v337 = vadd.f32 %v311, %v335
    %v338 = vlaneseq
    %v339 = vshrl.u32 %v338, 7
    %v340 = vsub.s32 2, %v339
    %v341 = vrot.slane %v285, %v340
    %343 = vbcast.lane.b32.xlu0 %v341, 256
    %v344 = vpop.permute.xlu0 %343
    %v345 = vlaneseq
    %v346 = vshrl.u32 %v345, 7
    %v347 = vsub.s32 2, %v346
    %v348 = vrot.slane %v287, %v347
    %350 = vbcast.lane.b32.xlu0 %v348, 256
    %v351 = vpop.permute.xlu0 %350
    %v352 = vlaneseq
    %v353 = vshrl.u32 %v352, 7
    %v354 = vsub.s32 2, %v353
    %v355 = vrot.slane %v142, %v354
    %v356 = vlaneseq
    %v357 = vshrl.u32 %v356, 7
    %v358 = vsub.s32 2, %v357
    %v359 = vrot.slane %v247, %v358
    %v360 = vmul.f32 %v344, %v355
    %v361 = vmul.f32 %v351, %v359
    %v362 = vadd.f32 %v336, %v360
    %v363 = vadd.f32 %v337, %v361
    %v364 = vlaneseq
    %v365 = vshrl.u32 %v364, 7
    %v366 = vsub.s32 3, %v365
    %v367 = vrot.slane %v285, %v366
    %369 = vbcast.lane.b32.xlu0 %v367, 256
    %v370 = vpop.permute.xlu0 %369
    %v371 = vlaneseq
    %v372 = vshrl.u32 %v371, 7
    %v373 = vsub.s32 3, %v372
    %v374 = vrot.slane %v287, %v373
    %376 = vbcast.lane.b32.xlu0 %v374, 256
    %v377 = vpop.permute.xlu0 %376
    %v378 = vlaneseq
    %v379 = vshrl.u32 %v378, 7
    %v380 = vsub.s32 3, %v379
    %v381 = vrot.slane %v142, %v380
    %v382 = vlaneseq
    %v383 = vshrl.u32 %v382, 7
    %v384 = vsub.s32 3, %v383
    %v385 = vrot.slane %v247, %v384
    %v386 = vmul.f32 %v370, %v381
    %v387 = vmul.f32 %v377, %v385
    %v388 = vadd.f32 %v362, %v386
    %v389 = vadd.f32 %v363, %v387
    %v390 = vld [vmem:[%s4] sm:$0xff]
    %v391 = vld [vmem:[%s4 + $0x8] sm:$0xff]
    %v392 = vld [vmem:[%s4 + $0x10] sm:$0xff]
    %v393 = vld [vmem:[%s4 + $0x18] sm:$0xff]
    %v394 = vld [vmem:[%s4 + $0x20] sm:$0xff]
    %v395 = vld [vmem:[%s4 + $0x28] sm:$0xff]
    %v396 = vld [vmem:[%s4 + $0x30] sm:$0xff]
    %v397 = vld [vmem:[%s4 + $0x38] sm:$0xff]
    %v398 = vld [vmem:[%s4 + $0x40] sm:$0xff]
    %v399 = vld [vmem:[%s4 + $0x48] sm:$0xff]
    %v400 = vld [vmem:[%s4 + $0x50] sm:$0xff]
    %v401 = vld [vmem:[%s4 + $0x58] sm:$0xff]
    %v402 = vld [vmem:[%s4 + $0x60] sm:$0xff]
    %v403 = vld [vmem:[%s4 + $0x68] sm:$0xff]
    %v404 = vld [vmem:[%s4 + $0x70] sm:$0xff]
    %v405 = vld [vmem:[%s4 + $0x78] sm:$0xff]
    %v406 = vld [vmem:[%s5] sm:$0x1]
    %v408 = vlaneseq
    %v409 = vshrl.u32 %v408, 7
    %v410 = vsub.s32 0, %v409
    %v411 = vrot.slane %v406, %v410
    %v415 = vcombine.low %v46, %v47
    %417 = vmatprep.subr.mxu0 0.0
    %418 = vmatpush1.msra.mxu0 %v390
    %419 = vmatprep.subr.mxu0 0.0
    %420 = vmatpush1.msra.mxu0 %v391
    %421 = vmatprep.subr.mxu0 0.0
    %422 = vmatpush1.msra.mxu0 %v392
    %423 = vmatprep.subr.mxu0 0.0
    %424 = vmatpush1.msra.mxu0 %v393
    %425 = vmatprep.subr.mxu0 0.0
    %426 = vmatpush1.msra.mxu0 %v394
    %427 = vmatprep.subr.mxu0 0.0
    %428 = vmatpush1.msra.mxu0 %v395
    %429 = vmatprep.subr.mxu0 0.0
    %430 = vmatpush1.msra.mxu0 %v396
    %431 = vmatprep.subr.mxu0 0.0
    %432 = vmatpush1.msra.mxu0 %v397
    %433 = vmatprep.subr.mxu0 0.0
    %434 = vmatpush1.msra.mxu0 %v398
    %435 = vmatprep.subr.mxu0 0.0
    %436 = vmatpush1.msra.mxu0 %v399
    %437 = vmatprep.subr.mxu0 0.0
    %438 = vmatpush1.msra.mxu0 %v400
    %439 = vmatprep.subr.mxu0 0.0
    %440 = vmatpush1.msra.mxu0 %v401
    %441 = vmatprep.subr.mxu0 0.0
    %442 = vmatpush1.msra.mxu0 %v402
    %443 = vmatprep.subr.mxu0 0.0
    %444 = vmatpush1.msra.mxu0 %v403
    %445 = vmatprep.subr.mxu0 0.0
    %446 = vmatpush1.msra.mxu0 %v404
    %447 = vmatprep.subr.mxu0 0.0
    %448 = vmatpush1.msra.mxu0 %v405
    %449 = vmatprep.subr.mxu0 0.0
    %450 = vmatpush1.msra.mxu0 0.0
    %451 = vmatprep.subr.mxu0 0.0
    %452 = vmatpush1.msra.mxu0 0.0
    %453 = vmatprep.subr.mxu0 0.0
    %454 = vmatpush1.msra.mxu0 0.0
    %455 = vmatprep.subr.mxu0 0.0
    %456 = vmatpush1.msra.mxu0 0.0
    %457 = vmatprep.subr.mxu0 0.0
    %458 = vmatpush1.msra.mxu0 0.0
    %459 = vmatprep.subr.mxu0 0.0
    %460 = vmatpush1.msra.mxu0 0.0
    %461 = vmatprep.subr.mxu0 0.0
    %462 = vmatpush1.msra.mxu0 0.0
    %463 = vmatprep.subr.mxu0 0.0
    %464 = vmatpush1.msra.mxu0 0.0
    %465 = vmatprep.subr.mxu0 0.0
    %466 = vmatpush1.msra.mxu0 0.0
    %467 = vmatprep.subr.mxu0 0.0
    %468 = vmatpush1.msra.mxu0 0.0
    %469 = vmatprep.subr.mxu0 0.0
    %470 = vmatpush1.msra.mxu0 0.0
    %471 = vmatprep.subr.mxu0 0.0
    %472 = vmatpush1.msra.mxu0 0.0
    %473 = vmatprep.subr.mxu0 0.0
    %474 = vmatpush1.msra.mxu0 0.0
    %475 = vmatprep.subr.mxu0 0.0
    %476 = vmatpush1.msra.mxu0 0.0
    %477 = vmatprep.subr.mxu0 0.0
    %478 = vmatpush1.msra.mxu0 0.0
    %479 = vmatprep.subr.mxu0 0.0
    %480 = vmatpush1.msra.mxu0 0.0
    %481 = vmatprep.mubr.f32.mxu0 0.0
    %482 = vmatmul.mubr.f32.gmra.mrb[0].mxu0 %v415
    %v483 = vpop.f32.mrb[0].mxu0
    %v484 = vadd.f32 %v411, %v483
    %v485 = vpop.f32.mrb[0].mxu0
    %486 = vdwg.mxu0
    %v487 = vld [vmem:[%s7] sm:$0xff]
    %v488 = vld [vmem:[%s7 + $0x8] sm:$0xff]
    %v489 = vld [vmem:[%s7 + $0x10] sm:$0xff]
    %v490 = vld [vmem:[%s7 + $0x18] sm:$0xff]
    %v491 = vld [vmem:[%s7 + $0x20] sm:$0xff]
    %v492 = vld [vmem:[%s7 + $0x28] sm:$0xff]
    %v493 = vld [vmem:[%s7 + $0x30] sm:$0xff]
    %v494 = vld [vmem:[%s7 + $0x38] sm:$0xff]
    %v495 = vld [vmem:[%s7 + $0x40] sm:$0xff]
    %v496 = vld [vmem:[%s7 + $0x48] sm:$0xff]
    %v497 = vld [vmem:[%s7 + $0x50] sm:$0xff]
    %v498 = vld [vmem:[%s7 + $0x58] sm:$0xff]
    %v499 = vld [vmem:[%s7 + $0x60] sm:$0xff]
    %v500 = vld [vmem:[%s7 + $0x68] sm:$0xff]
    %v501 = vld [vmem:[%s7 + $0x70] sm:$0xff]
    %v502 = vld [vmem:[%s7 + $0x78] sm:$0xff]
    %503 = vmatprep.subr.mxu0 0.0
    %504 = vmatpush1.msra.mxu0 %v487
    %505 = vmatprep.subr.mxu0 0.0
    %506 = vmatpush1.msra.mxu0 %v488
    %507 = vmatprep.subr.mxu0 0.0
    %508 = vmatpush1.msra.mxu0 %v489
    %509 = vmatprep.subr.mxu0 0.0
    %510 = vmatpush1.msra.mxu0 %v490
    %511 = vmatprep.subr.mxu0 0.0
    %512 = vmatpush1.msra.mxu0 %v491
    %513 = vmatprep.subr.mxu0 0.0
    %514 = vmatpush1.msra.mxu0 %v492
    %515 = vmatprep.subr.mxu0 0.0
    %516 = vmatpush1.msra.mxu0 %v493
    %517 = vmatprep.subr.mxu0 0.0
    %518 = vmatpush1.msra.mxu0 %v494
    %519 = vmatprep.subr.mxu0 0.0
    %520 = vmatpush1.msra.mxu0 %v495
    %521 = vmatprep.subr.mxu0 0.0
    %522 = vmatpush1.msra.mxu0 %v496
    %523 = vmatprep.subr.mxu0 0.0
    %524 = vmatpush1.msra.mxu0 %v497
    %525 = vmatprep.subr.mxu0 0.0
    %526 = vmatpush1.msra.mxu0 %v498
    %527 = vmatprep.subr.mxu0 0.0
    %528 = vmatpush1.msra.mxu0 %v499
    %529 = vmatprep.subr.mxu0 0.0
    %530 = vmatpush1.msra.mxu0 %v500
    %531 = vmatprep.subr.mxu0 0.0
    %532 = vmatpush1.msra.mxu0 %v501
    %533 = vmatprep.subr.mxu0 0.0
    %534 = vmatpush1.msra.mxu0 %v502
    %535 = vmatprep.subr.mxu0 0.0
    %536 = vmatpush1.msra.mxu0 0.0
    %537 = vmatprep.subr.mxu0 0.0
    %538 = vmatpush1.msra.mxu0 0.0
    %539 = vmatprep.subr.mxu0 0.0
    %540 = vmatpush1.msra.mxu0 0.0
    %541 = vmatprep.subr.mxu0 0.0
    %542 = vmatpush1.msra.mxu0 0.0
    %543 = vmatprep.subr.mxu0 0.0
    %544 = vmatpush1.msra.mxu0 0.0
    %545 = vmatprep.subr.mxu0 0.0
    %546 = vmatpush1.msra.mxu0 0.0
    %547 = vmatprep.subr.mxu0 0.0
    %548 = vmatpush1.msra.mxu0 0.0
    %549 = vmatprep.subr.mxu0 0.0
    %550 = vmatpush1.msra.mxu0 0.0
    %551 = vmatprep.subr.mxu0 0.0
    %552 = vmatpush1.msra.mxu0 0.0
    %553 = vmatprep.subr.mxu0 0.0
    %554 = vmatpush1.msra.mxu0 0.0
    %555 = vmatprep.subr.mxu0 0.0
    %556 = vmatpush1.msra.mxu0 0.0
    %557 = vmatprep.subr.mxu0 0.0
    %558 = vmatpush1.msra.mxu0 0.0
    %559 = vmatprep.subr.mxu0 0.0
    %560 = vmatpush1.msra.mxu0 0.0
    %561 = vmatprep.subr.mxu0 0.0
    %562 = vmatpush1.msra.mxu0 0.0
    %563 = vmatprep.subr.mxu0 0.0
    %564 = vmatpush1.msra.mxu0 0.0
    %565 = vmatprep.subr.mxu0 0.0
    %566 = vmatpush1.msra.mxu0 0.0
    %567 = vmatprep.mubr.f32.mxu0 0.0
    %568 = vmatmul.mubr.f32.gmra.mrb[0].mxu0 %v484
    %v569 = vpop.f32.mrb[0].mxu0
    %v570 = vadd.f32 0.0, %v569
    %v571 = vpop.f32.mrb[0].mxu0
    %572 = vdwg.mxu0
    %v574 = vcombine.high %v570, %v570
    %v576 = vsel %vm249, %v570, -inf
    %v577 = vrot.slane %v576, 4
    %v578 = vmax.f32 %v576, %v577
    %v579 = vrot.slane %v578, 2
    %v580 = vmax.f32 %v578, %v579
    %v581 = vrot.slane %v580, 1
    %v582 = vmax.f32 %v580, %v581
    %v583 = vsel %vm249, %v574, -inf
    %v584 = vrot.slane %v583, 4
    %v585 = vmax.f32 %v583, %v584
    %v586 = vrot.slane %v585, 2
    %v587 = vmax.f32 %v585, %v586
    %v588 = vrot.slane %v587, 1
    %v589 = vmax.f32 %v587, %v588
    %v590 = vsub.f32 %v570, %v582
    %v591 = vsub.f32 %v574, %v589
    %v592 = vmul.f32 %v590, 1.442695
    %v593 = vpow.pop %v592
    %v594 = vmul.f32 %v591, 1.442695
    %v595 = vpow.pop %v594
    %v596 = vsel %vm249, %v593, 0.0
    %v597 = vrot.slane %v596, 4
    %v598 = vadd.f32 %v596, %v597
    %v599 = vrot.slane %v598, 2
    %v600 = vadd.f32 %v598, %v599
    %v601 = vrot.slane %v600, 1
    %v602 = vadd.f32 %v600, %v601
    %v603 = vsel %vm249, %v595, 0.0
    %v604 = vrot.slane %v603, 4
    %v605 = vadd.f32 %v603, %v604
    %v606 = vrot.slane %v605, 2
    %v607 = vadd.f32 %v605, %v606
    %v608 = vrot.slane %v607, 1
    %v609 = vadd.f32 %v607, %v608
    %v610 = vrcp.pop %v602
    %v611 = vmul.f32 %v593, %v610
    %v612 = vrcp.pop %v609
    %v613 = vmul.f32 %v595, %v612
    %615 = vset.pattern.permute.xlu0 0
    %616 = vperm.xlu0 %615, %v611
    %v617 = vpop.permute.xlu0 %616
    %v620 = vunpack.c.l.s4 839922192
    %v621 = vunpack.c.0.s8 %v620
    %v622 = vlaneseq
    %v623 = vshrl.u32 %v622, 7
    %v624 = vsub.s32 %v621, %v623
    %v625 = vrot.slane %v617, %v624
    %627 = vset.pattern.permute.xlu0 0
    %628 = vperm.xlu0 %627, %v613
    %v629 = vpop.permute.xlu0 %628
    %v632 = vunpack.c.l.s4 839922192
    %v633 = vunpack.c.0.s8 %v632
    %v634 = vlaneseq
    %v635 = vshrl.u32 %v634, 7
    %v636 = vsub.s32 %v633, %v635
    %v637 = vrot.slane %v629, %v636
    %v638 = vlaneseq
    %v639 = vshrl.u32 %v638, 7
    %v640 = vsub.s32 0, %v639
    %v641 = vrot.slane %v388, %v640
    %v642 = vlaneseq
    %v643 = vshrl.u32 %v642, 7
    %v644 = vsub.s32 0, %v643
    %v645 = vrot.slane %v389, %v644
    %v646 = vmul.f32 %v625, %v641
    %v647 = vmul.f32 %v637, %v645
    %648 = vset.pattern.permute.xlu0 1
    %649 = vperm.xlu0 %648, %v611
    %v650 = vpop.permute.xlu0 %649
    %v653 = vunpack.c.l.s4 839922192
    %v654 = vunpack.c.0.s8 %v653
    %v655 = vlaneseq
    %v656 = vshrl.u32 %v655, 7
    %v657 = vsub.s32 %v654, %v656
    %v658 = vrot.slane %v650, %v657
    %659 = vset.pattern.permute.xlu0 1
    %660 = vperm.xlu0 %659, %v613
    %v661 = vpop.permute.xlu0 %660
    %v664 = vunpack.c.l.s4 839922192
    %v665 = vunpack.c.0.s8 %v664
    %v666 = vlaneseq
    %v667 = vshrl.u32 %v666, 7
    %v668 = vsub.s32 %v665, %v667
    %v669 = vrot.slane %v661, %v668
    %v670 = vlaneseq
    %v671 = vshrl.u32 %v670, 7
    %v672 = vsub.s32 1, %v671
    %v673 = vrot.slane %v388, %v672
    %v674 = vlaneseq
    %v675 = vshrl.u32 %v674, 7
    %v676 = vsub.s32 1, %v675
    %v677 = vrot.slane %v389, %v676
    %v678 = vmul.f32 %v658, %v673
    %v679 = vmul.f32 %v669, %v677
    %v680 = vadd.f32 %v646, %v678
    %v681 = vadd.f32 %v647, %v679
    %682 = vset.pattern.permute.xlu0 2
    %683 = vperm.xlu0 %682, %v611
    %v684 = vpop.permute.xlu0 %683
    %v687 = vunpack.c.l.s4 839922192
    %v688 = vunpack.c.0.s8 %v687
    %v689 = vlaneseq
    %v690 = vshrl.u32 %v689, 7
    %v691 = vsub.s32 %v688, %v690
    %v692 = vrot.slane %v684, %v691
    %693 = vset.pattern.permute.xlu0 2
    %694 = vperm.xlu0 %693, %v613
    %v695 = vpop.permute.xlu0 %694
    %v698 = vunpack.c.l.s4 839922192
    %v699 = vunpack.c.0.s8 %v698
    %v700 = vlaneseq
    %v701 = vshrl.u32 %v700, 7
    %v702 = vsub.s32 %v699, %v701
    %v703 = vrot.slane %v695, %v702
    %v704 = vlaneseq
    %v705 = vshrl.u32 %v704, 7
    %v706 = vsub.s32 2, %v705
    %v707 = vrot.slane %v388, %v706
    %v708 = vlaneseq
    %v709 = vshrl.u32 %v708, 7
    %v710 = vsub.s32 2, %v709
    %v711 = vrot.slane %v389, %v710
    %v712 = vmul.f32 %v692, %v707
    %v713 = vmul.f32 %v703, %v711
    %v714 = vadd.f32 %v680, %v712
    %v715 = vadd.f32 %v681, %v713
    %v716 = vmul.f32 %v714, %v46
    %v717 = vmul.f32 %v715, %v47
    %vm718 = vcmask 1043456
    %v719 = vsel %vm718, %v716, 0.0
    %720 = vadd.xlane.f32.xlu0 %v719
    %v721 = vpop.xlane.xlu0 %720
    %v722 = vsel %vm718, %v717, 0.0
    %723 = vadd.xlane.f32.xlu0 %v722
    %v724 = vpop.xlane.xlu0 %723
    %v727 = vlaneseq
    %v728 = vand.u32 %v727, 127
    %v729 = vlaneseq
    %v730 = vshrl.u32 %v729, 7
    %v731 = vsub.s32 %v728, %v730
    %v732 = vrot.slane %v721, %v731
    %v733 = vlaneseq
    %v734 = vshrl.u32 %v733, 7
    %v735 = vsub.s32 %v728, %v734
    %v736 = vrot.slane %v724, %v735
    %vm737 = vcmask 1041409
    %v738 = vsel %vm737, %v736, %v732
    %vm740 = vcmask 25600
    %741 = vst.msk [vmem:[#allocation5] sm:$0x3] %vm740, %v738
    // Predicated region
    $region38: #{tpu_custom_call.1} parent=1 // pred_check
      _
    $region39: #{tpu_custom_call.1} parent=1 // pred_check_branch
      %743 = sbr.rel (0) target = $region41
    $region40: #{tpu_custom_call.1} parent=1 // pred_region
      %s745 = ssub.s32 32, 32
      %746 = vsyncadd [#allocation4], %s745
      %s748 = sshll.u32 [#allocation5], 4
      %s749 = int_to_ptr.vmem [resolvable:$true] %s748
      %751 = dma.vmem_to_hbm [thread:$0]  %s749, 32, %s8, [#allocation4]
    $region41: #{tpu_custom_call.1} parent=1 // pred_fallthru
      _
    // Predicated region
    $region42: #{tpu_custom_call.1} parent=1 // pred_check
      _
    $region43: #{tpu_custom_call.1} parent=1 // pred_check_branch
      %753 = sbr.rel (0) target = $region45
    $region44: #{tpu_custom_call.1} parent=1 // pred_region
      %754 = dma.done [#allocation4], 32
    $region45: #{tpu_custom_call.1} parent=1 // pred_fallthru
      _
    %755 = vsyncpa [#allocation3], 1
    %756 = vsyncpa [#allocation4], 1

</llo_original>
